<compile_context>
chip_gen: v5e
topology: v5e:2x2
jax: 0.10.0
libtpu: 0.0.40
codegen_flags: <defaults>
</compile_context>

<pallas_src>
from functools import partial

import jax
import jax.numpy as jnp
from jax.experimental import pallas as pl
from jax.experimental.pallas import tpu as pltpu

EPS = 1e-5


# --------------------------------------------------------------------------
# Kernel
# --------------------------------------------------------------------------
def _make_kernel(c_in, c_out, per_tap, use_bf16):
    mxu_dtype = jnp.bfloat16 if use_bf16 else jnp.float32

    def kernel(x_ref, w1_ref, t1_ref, w2_ref, t2_ref, o_ref):
        x = x_ref[...]                                        # (c_in, L) f32

        def conv3(w_ref_, a, c, extra=None):
            # Packed weight columns: [W_k0 | W_k1 | W_k2 (| W_downsample)].
            am = a.astype(mxu_dtype)
            ex = extra.astype(mxu_dtype) if extra is not None else None
            z = jnp.zeros((am.shape[0], 1), mxu_dtype)
            prev = jnp.concatenate([z, am[:, :-1]], axis=1)   # input[l-1], 0 at l==0
            nxt = jnp.concatenate([am[:, 1:], z], axis=1)     # input[l+1], 0 at l==L-1
            if per_tap:
                # Three (+1) K=C matmuls: no 3x channel-concat copy of `a`.
                out = jnp.dot(w_ref_[:, c:2 * c].astype(mxu_dtype), am,
                              preferred_element_type=jnp.float32)
                out = out + jnp.dot(w_ref_[:, :c].astype(mxu_dtype), prev,
                                    preferred_element_type=jnp.float32)
                out = out + jnp.dot(w_ref_[:, 2 * c:3 * c].astype(mxu_dtype), nxt,
                                    preferred_element_type=jnp.float32)
                if ex is not None:
                    out = out + jnp.dot(w_ref_[:, 3 * c:].astype(mxu_dtype), ex,
                                        preferred_element_type=jnp.float32)
                return out
            # Single matmul over the stacked taps (fills the MXU for small C).
            pieces = [prev, am, nxt] + ([ex] if ex is not None else [])
            stack = jnp.concatenate(pieces, axis=0)
            return jnp.dot(w_ref_[...].astype(mxu_dtype), stack,
                           preferred_element_type=jnp.float32)

        # conv1 (+ folded bn1) + ReLU -- h stays in vregs/VMEM, no HBM round trip.
        h = jnp.maximum(conv3(w1_ref, x, c_in) + t1_ref[...], 0.0)     # (c_out, L) f32

        # conv2 (+ folded bn2) merged with the 1x1 downsample (+ folded bn) of x;
        # shared shift (t2 + td), residual add already included, final ReLU.
        out = conv3(w2_ref, h, c_out, extra=x) + t2_ref[...]
        o_ref[...] = jnp.maximum(out, 0.0).astype(o_ref.dtype)

    return kernel


# --------------------------------------------------------------------------
# Wrapper
# --------------------------------------------------------------------------
def _fold_bn(bias, gamma, beta, mean, var):
    """Fold conv bias + inference-mode BatchNorm into per-channel scale/shift."""
    scale = gamma / jnp.sqrt(var + EPS)
    shift = scale * (bias - mean) + beta
    return scale, shift


@partial(jax.jit, static_argnames=("per_tap", "use_bf16"))
def residual_block(x, params, per_tap=False, use_bf16=False):
    n, c_in, seq_len = x.shape
    c_out = params["w1"].shape[0]
    w_dtype = jnp.bfloat16 if use_bf16 else jnp.float32

    # ---- fold BN into weights / per-channel shifts (weights are tiny; negligible) ----
    s1, t1 = _fold_bn(params["b1"], params["g1"], params["be1"], params["m1"], params["v1"])
    s2, t2 = _fold_bn(params["b2"], params["g2"], params["be2"], params["m2"], params["v2"])
    sd, td = _fold_bn(params["bd"], params["gd"], params["bed"], params["md"], params["vd"])

    def pack_conv3(w, scale):
        # (C_out, C_in, 3) -> (C_out, 3*C_in), tap-major / channel-minor columns.
        co, ci, _ = w.shape
        return jnp.transpose(w * scale[:, None, None], (0, 2, 1)).reshape(co, 3 * ci)

    w1f = pack_conv3(params["w1"], s1).astype(w_dtype)                  # (c_out, 3*c_in)
    wdf = params["wd"][:, :, 0] * sd[:, None]                           # (c_out, c_in)
    w2f = jnp.concatenate([pack_conv3(params["w2"], s2), wdf],
                          axis=1).astype(w_dtype)                       # (c_out, 3*c_out+c_in)
    t1p = t1[:, None].astype(jnp.float32)                               # (c_out, 1)
    t2p = (t2 + td)[:, None].astype(jnp.float32)                        # downsample shift folded in

    kernel = _make_kernel(c_in, c_out, per_tap, use_bf16)

    # ---- VMEM budget: raise the scoped limit only when the per-sample slab needs it --
    f32b, wbytes = 4, (2 if use_bf16 else 4)
    k2 = 3 * c_out + c_in
    blocks = f32b * seq_len * (c_in + c_out)                    # x block + out block
    weights = wbytes * c_out * (3 * c_in + k2) + f32b * 2 * c_out
    live = wbytes * seq_len * (3 * c_in + k2) + f32b * seq_len * 3 * c_out
    est = 2 * (blocks + weights) + live + (1 << 20)             # x2: auto double-buffering
    cp_kwargs = dict(dimension_semantics=("parallel",))
    if est > (24 << 20):
        try:
            cap = getattr(pltpu.get_tpu_info(), "vmem_capacity_bytes", 64 << 20)
        except Exception:
            cap = 64 << 20
        cp_kwargs["vmem_limit_bytes"] = int(min(est, int(0.9 * cap)))

    out = pl.pallas_call(
        kernel,
        out_shape=jax.ShapeDtypeStruct((n, c_out, seq_len), x.dtype),
        grid=(n,),
        in_specs=[
            pl.BlockSpec((None, c_in, seq_len), lambda b: (b, 0, 0)),     # x, native layout
            pl.BlockSpec((c_out, 3 * c_in), lambda b: (0, 0)),            # conv1 weights
            pl.BlockSpec((c_out, 1), lambda b: (0, 0)),                   # bn1 shift
            pl.BlockSpec((c_out, 3 * c_out + c_in), lambda b: (0, 0)),    # conv2 + downsample w
            pl.BlockSpec((c_out, 1), lambda b: (0, 0)),                   # bn2 + downsample shift
        ],
        out_specs=pl.BlockSpec((None, c_out, seq_len), lambda b: (b, 0, 0)),
        compiler_params=pltpu.CompilerParams(**cp_kwargs),
    )(x, w1f, t1p, w2f, t2p)
    return out


# ---------------- pure-JAX reference (for correctness check) ----------------
def _conv1d(x, w, b, stride=1, pad=1):
    y = jax.lax.conv_general_dilated(
        x, w, window_strides=(stride,), padding=[(pad, pad)],
        dimension_numbers=("NCH", "OIH", "NCH"))
    return y + b[None, :, None]


def _bn(x, gamma, beta, mean, var):
    return ((x - mean[None, :, None]) / jnp.sqrt(var[None, :, None] + EPS)
            * gamma[None, :, None] + beta[None, :, None])


def ref_forward(x, p):
    out = jax.nn.relu(_bn(_conv1d(x, p["w1"], p["b1"]),
                          p["g1"], p["be1"], p["m1"], p["v1"]))
    out = _bn(_conv1d(out, p["w2"], p["b2"]),
              p["g2"], p["be2"], p["m2"], p["v2"])
    ident = _bn(_conv1d(x, p["wd"], p["bd"], pad=0),
                p["gd"], p["bed"], p["md"], p["vd"])
    return jax.nn.relu(out + ident)


def make_params(key, c_in, c_out):
    ks = jax.random.split(key, 16)
    n = lambda k, s: jax.random.normal(k, s, jnp.float32)
    return {
        "w1": 0.2 * n(ks[0], (c_out, c_in, 3)),
        "b1": 0.1 * n(ks[1], (c_out,)),
        "g1": 1.0 + 0.1 * n(ks[2], (c_out,)),
        "be1": 0.1 * n(ks[3], (c_out,)),
        "m1": 0.1 * n(ks[4], (c_out,)),
        "v1": jax.random.uniform(ks[5], (c_out,), jnp.float32, 0.5, 1.5),
        "w2": 0.2 * n(ks[6], (c_out, c_out, 3)),
        "b2": 0.1 * n(ks[7], (c_out,)),
        "g2": 1.0 + 0.1 * n(ks[8], (c_out,)),
        "be2": 0.1 * n(ks[9], (c_out,)),
        "m2": 0.1 * n(ks[10], (c_out,)),
        "v2": jax.random.uniform(ks[11], (c_out,), jnp.float32, 0.5, 1.5),
        "wd": 0.2 * n(ks[12], (c_out, c_in, 1)),
        "bd": 0.1 * n(ks[13], (c_out,)),
        "gd": 1.0 + 0.1 * n(ks[14], (c_out,)),
        "bed": 0.1 * n(ks[15], (c_out,)),
        "md": jnp.zeros((c_out,), jnp.float32),
        "vd": jnp.ones((c_out,), jnp.float32),
    }


if __name__ == "__main__":
    N, C_IN, C_OUT, L = 2, 4, 8, 16   # stride=1, in != out -> downsample branch active
    key = jax.random.PRNGKey(0)
    kx, kp = jax.random.split(key)
    x = jax.random.normal(kx, (N, C_IN, L), jnp.float32)
    params = make_params(kp, C_IN, C_OUT)

    ref = ref_forward(x, params)

    # default path: single-matmul im2col, f32 MXU operands (exact parity)
    out = jax.block_until_ready(residual_block(x, params))
    assert out.shape == (N, C_OUT, L)
    assert jnp.allclose(out, ref, atol=1e-3, rtol=1e-3), "f32/concat mismatch vs JAX reference"

    # per-tap matmul path (for large channel counts) -- still f32
    out_pt = jax.block_until_ready(residual_block(x, params, per_tap=True))
    assert jnp.allclose(out_pt, ref, atol=1e-3, rtol=1e-3), "f32/per-tap mismatch vs JAX reference"

    # bf16 MXU-operand path (f32 accumulation / f32 epilogue)
    out_bf = jax.block_until_ready(residual_block(x, params, use_bf16=True))
    assert jnp.allclose(out_bf, ref, atol=5e-2, rtol=5e-2), "bf16 path mismatch vs JAX reference"

    print("KERNEL_OK")
</pallas_src>

<mosaic_0001>
module attributes {stable_mosaic.version = 11 : i64} {
  func.func @kernel(%arg0: i32, %arg1: memref<1x4x16xf32, #tpu.memory_space<vmem>>, %arg2: memref<8x12xf32, #tpu.memory_space<vmem>>, %arg3: memref<8x1xf32, #tpu.memory_space<vmem>>, %arg4: memref<8x28xf32, #tpu.memory_space<vmem>>, %arg5: memref<8x1xf32, #tpu.memory_space<vmem>>, %arg6: memref<1x8x16xf32, #tpu.memory_space<vmem>>) attributes {dimension_semantics = [#tpu.dimension_semantics<parallel>], iteration_bounds = array<i64: 2>, scalar_prefetch = 0 : i64, scratch_operands = 0 : i64, tpu.core_type = #tpu.core_type<tc>, window_params = [{transform_indices = @transform_0, window_bounds = array<i64: 1, 4, 16>}, {pipeline_mode = #tpu.pipeline_mode<synchronous>, transform_indices = @transform_1, window_bounds = array<i64: 8, 12>}, {pipeline_mode = #tpu.pipeline_mode<synchronous>, transform_indices = @transform_2, window_bounds = array<i64: 8, 1>}, {pipeline_mode = #tpu.pipeline_mode<synchronous>, transform_indices = @transform_3, window_bounds = array<i64: 8, 28>}, {pipeline_mode = #tpu.pipeline_mode<synchronous>, transform_indices = @transform_4, window_bounds = array<i64: 8, 1>}, {transform_indices = @transform_5, window_bounds = array<i64: 1, 8, 16>}]} {
    %c0 = arith.constant 0 : index
    %c0_0 = arith.constant 0 : index
    %c0_1 = arith.constant 0 : index
    %0 = vector.load %arg1[%c0, %c0_0, %c0_1] : memref<1x4x16xf32, #tpu.memory_space<vmem>>, vector<1x4x16xf32>
    %1 = vector.shape_cast %0 : vector<1x4x16xf32> to vector<4x16xf32>
    %cst = arith.constant 0.000000e+00 : f32
    %2 = vector.broadcast %cst : f32 to vector<4x1xf32>
    %3 = vector.extract_strided_slice %1 {offsets = [0, 0], sizes = [4, 15], strides = [1, 1]} : vector<4x16xf32> to vector<4x15xf32>
    %4 = tpu.concatenate %2, %3 in 1 : vector<4x1xf32>, vector<4x15xf32> -> vector<4x16xf32>
    %5 = vector.extract_strided_slice %1 {offsets = [0, 1], sizes = [4, 15], strides = [1, 1]} : vector<4x16xf32> to vector<4x15xf32>
    %6 = tpu.concatenate %5, %2 in 1 : vector<4x15xf32>, vector<4x1xf32> -> vector<4x16xf32>
    %7 = tpu.concatenate %4, %1, %6 in 0 : vector<4x16xf32>, vector<4x16xf32>, vector<4x16xf32> -> vector<12x16xf32>
    %c0_2 = arith.constant 0 : index
    %c0_3 = arith.constant 0 : index
    %8 = vector.load %arg2[%c0_2, %c0_3] : memref<8x12xf32, #tpu.memory_space<vmem>>, vector<8x12xf32>
    %cst_4 = arith.constant dense<0.000000e+00> : vector<8x16xf32>
    %9 = tpu.matmul %8, %7, %cst_4 {dimension_numbers = #tpu.dot_dimension_numbers<[1], [0], [0], [1], [0, 0, 1, 1], [], []>} : vector<8x12xf32>, vector<12x16xf32>, vector<8x16xf32> -> vector<8x16xf32>
    %c0_5 = arith.constant 0 : index
    %c0_6 = arith.constant 0 : index
    %10 = vector.load %arg3[%c0_5, %c0_6] : memref<8x1xf32, #tpu.memory_space<vmem>>, vector<8x1xf32>
    %11 = vector.broadcast %10 : vector<8x1xf32> to vector<8x16xf32>
    %12 = arith.addf %9, %11 : vector<8x16xf32>
    %cst_7 = arith.constant 0.000000e+00 : f32
    %13 = vector.broadcast %cst_7 : f32 to vector<8x16xf32>
    %14 = arith.maximumf %12, %13 : vector<8x16xf32>
    %cst_8 = arith.constant 0.000000e+00 : f32
    %15 = vector.broadcast %cst_8 : f32 to vector<8x1xf32>
    %16 = vector.extract_strided_slice %14 {offsets = [0, 0], sizes = [8, 15], strides = [1, 1]} : vector<8x16xf32> to vector<8x15xf32>
    %17 = tpu.concatenate %15, %16 in 1 : vector<8x1xf32>, vector<8x15xf32> -> vector<8x16xf32>
    %18 = vector.extract_strided_slice %14 {offsets = [0, 1], sizes = [8, 15], strides = [1, 1]} : vector<8x16xf32> to vector<8x15xf32>
    %19 = tpu.concatenate %18, %15 in 1 : vector<8x15xf32>, vector<8x1xf32> -> vector<8x16xf32>
    %20 = tpu.concatenate %17, %14, %19, %1 in 0 : vector<8x16xf32>, vector<8x16xf32>, vector<8x16xf32>, vector<4x16xf32> -> vector<28x16xf32>
    %c0_9 = arith.constant 0 : index
    %c0_10 = arith.constant 0 : index
    %21 = vector.load %arg4[%c0_9, %c0_10] : memref<8x28xf32, #tpu.memory_space<vmem>>, vector<8x28xf32>
    %cst_11 = arith.constant dense<0.000000e+00> : vector<8x16xf32>
    %22 = tpu.matmul %21, %20, %cst_11 {dimension_numbers = #tpu.dot_dimension_numbers<[1], [0], [0], [1], [0, 0, 1, 1], [], []>} : vector<8x28xf32>, vector<28x16xf32>, vector<8x16xf32> -> vector<8x16xf32>
    %c0_12 = arith.constant 0 : index
    %c0_13 = arith.constant 0 : index
    %23 = vector.load %arg5[%c0_12, %c0_13] : memref<8x1xf32, #tpu.memory_space<vmem>>, vector<8x1xf32>
    %24 = vector.broadcast %23 : vector<8x1xf32> to vector<8x16xf32>
    %25 = arith.addf %22, %24 : vector<8x16xf32>
    %cst_14 = arith.constant 0.000000e+00 : f32
    %26 = vector.broadcast %cst_14 : f32 to vector<8x16xf32>
    %27 = arith.maximumf %25, %26 : vector<8x16xf32>
    %c0_15 = arith.constant 0 : index
    %c0_16 = arith.constant 0 : index
    %c0_17 = arith.constant 0 : index
    %28 = vector.load %arg6[%c0_15, %c0_16, %c0_17] : memref<1x8x16xf32, #tpu.memory_space<vmem>>, vector<1x8x16xf32>
    %29 = vector.shape_cast %28 : vector<1x8x16xf32> to vector<8x16xf32>
    %30 = vector.shape_cast %27 : vector<8x16xf32> to vector<1x8x16xf32>
    tpu.vector_store %arg6[%c0_15, %c0_16, %c0_17], %30 {strides = array<i32>} : memref<1x8x16xf32, #tpu.memory_space<vmem>>, vector<1x8x16xf32>,
    return
  }
  func.func @transform_0(%arg0: i32) -> (i32, i32, i32) {
    %c0_i32 = arith.constant 0 : i32
    %c0_i32_0 = arith.constant 0 : i32
    %c0_i32_1 = arith.constant 0 : i32
    return %arg0, %c0_i32, %c0_i32_0 : i32, i32, i32
  }
  func.func @transform_1(%arg0: i32) -> (i32, i32) {
    %c0_i32 = arith.constant 0 : i32
    %c0_i32_0 = arith.constant 0 : i32
    %c0_i32_1 = arith.constant 0 : i32
    return %c0_i32, %c0_i32_0 : i32, i32
  }
  func.func @transform_2(%arg0: i32) -> (i32, i32) {
    %c0_i32 = arith.constant 0 : i32
    %c0_i32_0 = arith.constant 0 : i32
    %c0_i32_1 = arith.constant 0 : i32
    return %c0_i32, %c0_i32_0 : i32, i32
  }
  func.func @transform_3(%arg0: i32) -> (i32, i32) {
    %c0_i32 = arith.constant 0 : i32
    %c0_i32_0 = arith.constant 0 : i32
    %c0_i32_1 = arith.constant 0 : i32
    return %c0_i32, %c0_i32_0 : i32, i32
  }
  func.func @transform_4(%arg0: i32) -> (i32, i32) {
    %c0_i32 = arith.constant 0 : i32
    %c0_i32_0 = arith.constant 0 : i32
    %c0_i32_1 = arith.constant 0 : i32
    return %c0_i32, %c0_i32_0 : i32, i32
  }
  func.func @transform_5(%arg0: i32) -> (i32, i32, i32) {
    %c0_i32 = arith.constant 0 : i32
    %c0_i32_0 = arith.constant 0 : i32
    %c0_i32_1 = arith.constant 0 : i32
    return %arg0, %c0_i32, %c0_i32_0 : i32, i32, i32
  }
}

</mosaic_0001>

<llo_original>
// kernel: residual_block.1
$region0: #{residual_block.1}
  #allocation0 [shape = 'u32[]', space=smem, size = 0x4, offset = 0x4, fixed_abs, tag = 'smem constant byte address 0x4 - core index']
  #allocation1 [shape = 'u32[72,128]{1,0:T(1,128)}', space=vmem, size = 0x9000, scoped, tag = 'internal scratch']
  %s0 = inlined_call_operand.vmem [shape: f32[2,4,16], index: 0, kind: input, shape index: {}]
  %s1 = inlined_call_operand.vmem [shape: f32[8,12], index: 1, kind: input, shape index: {}]
  %s2 = inlined_call_operand.vmem [shape: f32[8,1], index: 2, kind: input, shape index: {}]
  %s3 = inlined_call_operand.vmem [shape: f32[8,28], index: 3, kind: input, shape index: {}]
  %s4 = inlined_call_operand.vmem [shape: f32[8,1], index: 4, kind: input, shape index: {}]
  %s5 = inlined_call_operand.hbm [shape: f32[2,8,16], index: 5, kind: output, shape index: {}]
  %s6 = sld [smem:[#allocation0]]
  $region53: #{residual_block.1} parent=0
    _
  %s8 = ssub.s32 1, %s6
  %s9 = scalar_select 0, %s8, %s6
  $region1: #{residual_block.1} parent=0
    #allocation2 [shape = 'u8[8192]{0}', space=vmem, size = 0x2000, scoped, tag = 'output window, operand 0']
    #allocation3 [shape = 's32[2]{0}', space=sflag, size = 0x8, scoped, tag = 'scoped memory for residual_block.1']
    %10 = vsyncpa [#allocation3], 0
    %s11 = scalar_lea.sflag [#allocation3], 1
    %12 = vsyncpa %s11, 0
    loop: start=0, step=1, limit=4
    $region2: #{residual_block.1} parent=1 // loop_pre_header
      _
    $region3: #{residual_block.1} parent=1 // loop_header
      %s14 = sphi 0, %s18
      %p15 = scmp.ge.s32.totalorder %s14, 4
      %s24 = sphi 0, %s26
      %s27 = sphi 0, %s24
      %s28 = sphi 0, %s27
      %s44 = sphi 0, %s28
      %s48 = sphi 0, %s48
      %s50 = sphi 0, %s48
      %s51 = sphi 0, %s50
      %s65 = sphi 0, %s51
      %s69 = sphi 0, %s69
      %s71 = sphi 0, %s69
      %s72 = sphi 0, %s71
      %s86 = sphi 0, %s72
      %s90 = sphi 0, %s90
      %s92 = sphi 0, %s90
      %s93 = sphi 0, %s92
      %s107 = sphi 0, %s93
      %s111 = sphi 0, %s111
      %s113 = sphi 0, %s111
      %s114 = sphi 0, %s113
      %s128 = sphi 0, %s114
      %s134 = sphi 0, %s136
      %s137 = sphi 0, %s134
      %s138 = sphi 0, %s137
      %s154 = sphi 0, %s138
    $region4: #{residual_block.1} parent=1 // loop_header_branch
      %17 = sbr.rel (%p15) target = $region8
    $region5: #{residual_block.1} parent=1 // loop_body
      %s19 = ssub.s32 %s14, 1
      %s20 = ssub.s32 %s14, 2
      %s21 = sadd.s32 %s14, 1
      %s22 = ssub.s32 %s14, %s21
      %p23 = scmp.eq.s32.totalorder %s22, 0
      %s25 = sadd.s32 %s24, 1
      %s26 = scalar_select %p23, %s24, %s25
      %p29 = pneg %p23
      %p30 = scmp.eq.s32.totalorder %s14, 1
      %p31 = por %p29, %p30
      %p32 = scmp.ne.s32.totalorder %s24, %s27
      %p33 = scmp.eq.s32.totalorder %s14, 0
      %p34 = por %p32, %p33
      %p35 = scmp.ne.s32.totalorder %s24, %s27
      %p36 = scmp.eq.s32.totalorder %s19, 1
      %p37 = por %p35, %p36
      %p38 = scmp.ne.s32.totalorder %s27, %s28
      %p39 = scmp.eq.s32.totalorder %s19, 0
      %p40 = por %p38, %p39
      %p41 = scmp.ne.s32.totalorder %s27, %s28
      %p42 = scmp.eq.s32.totalorder %s20, 1
      %p43 = por %p41, %p42
      %p45 = scmp.ne.s32.totalorder %s28, %s44
      %p46 = scmp.eq.s32.totalorder %s20, 0
      %p47 = por %p45, %p46
      %s49 = sadd.s32 %s48, 1
      %p52 = scmp.eq.s32.totalorder %s14, 1
      %p53 = scmp.ne.s32.totalorder %s48, %s50
      %p54 = scmp.eq.s32.totalorder %s14, 0
      %p55 = por %p53, %p54
      %p56 = scmp.ne.s32.totalorder %s48, %s50
      %p57 = scmp.eq.s32.totalorder %s19, 1
      %p58 = por %p56, %p57
      %p59 = scmp.ne.s32.totalorder %s50, %s51
      %p60 = scmp.eq.s32.totalorder %s19, 0
      %p61 = por %p59, %p60
      %p62 = scmp.ne.s32.totalorder %s50, %s51
      %p63 = scmp.eq.s32.totalorder %s20, 1
      %p64 = por %p62, %p63
      %p66 = scmp.ne.s32.totalorder %s51, %s65
      %p67 = scmp.eq.s32.totalorder %s20, 0
      %p68 = por %p66, %p67
      %s70 = sadd.s32 %s69, 1
      %p73 = scmp.eq.s32.totalorder %s14, 1
      %p74 = scmp.ne.s32.totalorder %s69, %s71
      %p75 = scmp.eq.s32.totalorder %s14, 0
      %p76 = por %p74, %p75
      %p77 = scmp.ne.s32.totalorder %s69, %s71
      %p78 = scmp.eq.s32.totalorder %s19, 1
      %p79 = por %p77, %p78
      %p80 = scmp.ne.s32.totalorder %s71, %s72
      %p81 = scmp.eq.s32.totalorder %s19, 0
      %p82 = por %p80, %p81
      %p83 = scmp.ne.s32.totalorder %s71, %s72
      %p84 = scmp.eq.s32.totalorder %s20, 1
      %p85 = por %p83, %p84
      %p87 = scmp.ne.s32.totalorder %s72, %s86
      %p88 = scmp.eq.s32.totalorder %s20, 0
      %p89 = por %p87, %p88
      %s91 = sadd.s32 %s90, 1
      %p94 = scmp.eq.s32.totalorder %s14, 1
      %p95 = scmp.ne.s32.totalorder %s90, %s92
      %p96 = scmp.eq.s32.totalorder %s14, 0
      %p97 = por %p95, %p96
      %p98 = scmp.ne.s32.totalorder %s90, %s92
      %p99 = scmp.eq.s32.totalorder %s19, 1
      %p100 = por %p98, %p99
      %p101 = scmp.ne.s32.totalorder %s92, %s93
      %p102 = scmp.eq.s32.totalorder %s19, 0
      %p103 = por %p101, %p102
      %p104 = scmp.ne.s32.totalorder %s92, %s93
      %p105 = scmp.eq.s32.totalorder %s20, 1
      %p106 = por %p104, %p105
      %p108 = scmp.ne.s32.totalorder %s93, %s107
      %p109 = scmp.eq.s32.totalorder %s20, 0
      %p110 = por %p108, %p109
      %s112 = sadd.s32 %s111, 1
      %p115 = scmp.eq.s32.totalorder %s14, 1
      %p116 = scmp.ne.s32.totalorder %s111, %s113
      %p117 = scmp.eq.s32.totalorder %s14, 0
      %p118 = por %p116, %p117
      %p119 = scmp.ne.s32.totalorder %s111, %s113
      %p120 = scmp.eq.s32.totalorder %s19, 1
      %p121 = por %p119, %p120
      %p122 = scmp.ne.s32.totalorder %s113, %s114
      %p123 = scmp.eq.s32.totalorder %s19, 0
      %p124 = por %p122, %p123
      %p125 = scmp.ne.s32.totalorder %s113, %s114
      %p126 = scmp.eq.s32.totalorder %s20, 1
      %p127 = por %p125, %p126
      %p129 = scmp.ne.s32.totalorder %s114, %s128
      %p130 = scmp.eq.s32.totalorder %s20, 0
      %p131 = por %p129, %p130
      %s132 = ssub.s32 %s14, %s21
      %p133 = scmp.eq.s32.totalorder %s132, 0
      %s135 = sadd.s32 %s134, 1
      %s136 = scalar_select %p133, %s134, %s135
      %p139 = pneg %p133
      %p140 = scmp.eq.s32.totalorder %s14, 1
      %p141 = por %p139, %p140
      %p142 = scmp.ne.s32.totalorder %s134, %s137
      %p143 = scmp.eq.s32.totalorder %s14, 0
      %p144 = por %p142, %p143
      %p145 = scmp.ne.s32.totalorder %s134, %s137
      %p146 = scmp.eq.s32.totalorder %s19, 1
      %p147 = por %p145, %p146
      %p148 = scmp.ne.s32.totalorder %s137, %s138
      %p149 = scmp.eq.s32.totalorder %s19, 0
      %p150 = por %p148, %p149
      %p151 = scmp.ne.s32.totalorder %s137, %s138
      %p152 = scmp.eq.s32.totalorder %s20, 1
      %p153 = por %p151, %p152
      %p155 = scmp.ne.s32.totalorder %s138, %s154
      %p156 = scmp.eq.s32.totalorder %s20, 0
      %p157 = por %p155, %p156
      %p158 = scmp.le.s32.totalorder 1, %s14
      %p159 = scmp.lt.s32.totalorder %s14, 3
      %p160 = pnand %p158, %p159
      %p161 = pneg %p160
      // Predicated region
      $region9: #{residual_block.1} parent=5 // pred_check
        _
      $region10: #{residual_block.1} parent=5 // pred_check_branch
        %163 = sbr.rel (%p160) target = $region12
      $region11: #{residual_block.1} parent=5 // pred_region
        %s164 = ssub.s32 %s14, 1
        // Predicated region
        $region13: #{residual_block.1} parent=11 // pred_check
          %p165 = pneg %p61
        $region14: #{residual_block.1} parent=11 // pred_check_branch
          %167 = sbr.rel (%p165) target = $region16
        $region15: #{residual_block.1} parent=11 // pred_region
          _
        $region16: #{residual_block.1} parent=11 // pred_fallthru
          _
        // Predicated region
        $region17: #{residual_block.1} parent=11 // pred_check
          %p168 = pneg %p82
        $region18: #{residual_block.1} parent=11 // pred_check_branch
          %170 = sbr.rel (%p168) target = $region20
        $region19: #{residual_block.1} parent=11 // pred_region
          _
        $region20: #{residual_block.1} parent=11 // pred_fallthru
          _
        // Predicated region
        $region21: #{residual_block.1} parent=11 // pred_check
          %p171 = pneg %p103
        $region22: #{residual_block.1} parent=11 // pred_check_branch
          %173 = sbr.rel (%p171) target = $region24
        $region23: #{residual_block.1} parent=11 // pred_region
          _
        $region24: #{residual_block.1} parent=11 // pred_fallthru
          _
        // Predicated region
        $region25: #{residual_block.1} parent=11 // pred_check
          %p174 = pneg %p124
        $region26: #{residual_block.1} parent=11 // pred_check_branch
          %176 = sbr.rel (%p174) target = $region28
        $region27: #{residual_block.1} parent=11 // pred_region
          _
        $region28: #{residual_block.1} parent=11 // pred_fallthru
          _
      $region12: #{residual_block.1} parent=5 // pred_fallthru
        _
      %p177 = scmp.lt.s32.totalorder %s14, 2
      // Predicated region
      $region29: #{residual_block.1} parent=5 // pred_check
        %p178 = pneg %p177
      $region30: #{residual_block.1} parent=5 // pred_check_branch
        %180 = sbr.rel (%p178) target = $region32
      $region31: #{residual_block.1} parent=5 // pred_region
        // Predicated region
        $region33: #{residual_block.1} parent=31 // pred_check
          %p181 = pneg %p34
        $region34: #{residual_block.1} parent=31 // pred_check_branch
          %183 = sbr.rel (%p181) target = $region36
        $region35: #{residual_block.1} parent=31 // pred_region
          %p184 = scmp.lt.s32.totalorder %s14, 1
          %s185 = scalar_select %p184, %s14, 1
          %s186 = smul.addr %s185, 4
          %s187 = scalar_lea.vmem %s0, %s186
        $region36: #{residual_block.1} parent=31 // pred_fallthru
          _
      $region32: #{residual_block.1} parent=5 // pred_fallthru
        _
      %p188 = scmp.le.s32.totalorder 1, %s14
      %p189 = scmp.lt.s32.totalorder %s14, 3
      %p190 = pnand %p188, %p189
      %p191 = pneg %p190
      // Predicated region
      $region37: #{residual_block.1} parent=5 // pred_check
        _
      $region38: #{residual_block.1} parent=5 // pred_check_branch
        %193 = sbr.rel (%p190) target = $region40
      $region39: #{residual_block.1} parent=5 // pred_region
        %s194 = ssub.s32 %s14, 1
        %p195 = scmp.lt.s32.totalorder %s19, 1
        %s196 = scalar_select %p195, %s19, 1
        %s197 = smul.addr %s196, 4
        %s198 = scalar_lea.vmem %s0, %s197
        %p199 = pneg %p40
        %p200 = pneg %p37
        %p201 = pneg %p61
        %p202 = pneg %p58
        %p203 = pneg %p82
        %p204 = pneg %p79
        %p205 = pneg %p103
        %p206 = pneg %p100
        %p207 = pneg %p124
        %p208 = pneg %p121
        %p209 = pneg %p150
        %p210 = pneg %p147
        %s211 = sand.u32 %s137, 1
        %s212 = scalar_lea.sflag [#allocation3], %s211
        %s213 = sand.u32 %s137, 1
        %s214 = smul.addr %s213, 8
        %s215 = scalar_lea.vmem [#allocation2], %s214
        %p216 = scmp.lt.s32.totalorder %s19, 1
        %s217 = scalar_select %p216, %s19, 1
        %s218 = smul.addr %s217, 4
        %s219 = scalar_lea.vmem %s0, %s218
        %v220 = vld [vmem:[%s219] sm:$0xf]
        %222 = vrot.lane.b32.xlu0 %v220, 1
        %v223 = vpop.permute.xlu0 %222
        %vm225 = vcmask 7168
        %v226 = vsel %vm225, 0.0, %v223
        %227 = vrot.lane.b32.xlu0 %v220, 127
        %v228 = vpop.permute.xlu0 %227
        %vm230 = vcmask 121856
        %v231 = vsel %vm230, %v228, 0.0
        %v232 = vrot.slane %v220, 4
        %vm234 = vcmask 1043456
        %v235 = vsel %vm234, %v226, %v232
        %v236 = vld [vmem:[%s1] sm:$0xff]
        %v237 = vld [vmem:[%s2] sm:$0xff]
        %239 = vset.pattern.permute.xlu0 0
        %240 = vperm.xlu0 %239, %v237
        %v241 = vpop.permute.xlu0 %240
        %vm243 = vcmask 97280
        %v245 = vsel %vm243, %v236, 0
        %v248 = vsel %vm234, %v231, 0
        %250 = vmatpush.msra.mxu0 0.0
        %251 = vmatpush.msra.mxu0 0.0
        %252 = vmatpush.msra.mxu0 0.0
        %253 = vmatpush.msra.mxu0 0.0
        %254 = vmatpush.msra.mxu0 0.0
        %255 = vmatpush.msra.mxu0 0.0
        %256 = vmatpush.msra.mxu0 0.0
        %257 = vmatpush.msra.mxu0 0.0
        %258 = vmatpush.msra.mxu0 0.0
        %259 = vmatpush.msra.mxu0 0.0
        %260 = vmatpush.msra.mxu0 0.0
        %261 = vmatpush.msra.mxu0 0.0
        %262 = vmatpush.msra.mxu0 0.0
        %263 = vmatpush.msra.mxu0 0.0
        %264 = vmatpush.msra.mxu0 %v248
        %265 = vmatpush.msra.mxu0 %v235
        %266 = vmatmul.f32.gmra.mxu0 %v245
        %v267 = vpop.f32.mrf.mxu0
        %v268 = vadd.f32 %v241, %v267
        %269 = vdwg.mxu0
        %v270 = vmax.f32 %v268, 0.0
        %272 = vrot.lane.b32.xlu0 %v270, 1
        %v273 = vpop.permute.xlu0 %272
        %v275 = vsel %vm225, 0.0, %v273
        %276 = vrot.lane.b32.xlu0 %v270, 127
        %v277 = vpop.permute.xlu0 %276
        %v279 = vsel %vm230, %v277, 0.0
        %v280 = vld [vmem:[%s3] sm:$0xff]
        %v281 = vld [vmem:[%s4] sm:$0xff]
        %283 = vset.pattern.permute.xlu0 0
        %284 = vperm.xlu0 %283, %v281
        %v285 = vpop.permute.xlu0 %284
        %vm287 = vcmask 228352
        %v289 = vsel %vm287, %v280, 0
        %v291 = vsel %vm234, %v220, 0
        %293 = vmatpush.msra.mxu0 0.0
        %294 = vmatpush.msra.mxu0 0.0
        %295 = vmatpush.msra.mxu0 0.0
        %296 = vmatpush.msra.mxu0 0.0
        %297 = vmatpush.msra.mxu0 0.0
        %298 = vmatpush.msra.mxu0 0.0
        %299 = vmatpush.msra.mxu0 0.0
        %300 = vmatpush.msra.mxu0 0.0
        %301 = vmatpush.msra.mxu0 0.0
        %302 = vmatpush.msra.mxu0 0.0
        %303 = vmatpush.msra.mxu0 0.0
        %304 = vmatpush.msra.mxu0 0.0
        %305 = vmatpush.msra.mxu0 %v291
        %306 = vmatpush.msra.mxu0 %v279
        %307 = vmatpush.msra.mxu0 %v270
        %308 = vmatpush.msra.mxu0 %v275
        %309 = vmatmul.f32.gmra.mxu0 %v289
        %v310 = vpop.f32.mrf.mxu0
        %v311 = vadd.f32 %v285, %v310
        %312 = vdwg.mxu0
        %v313 = vmax.f32 %v311, 0.0
        %vm314 = vcmask 130048
        %315 = vst.msk [vmem:[%s215] sm:$0xff] %vm314, %v313
        %s316 = sand.u32 %s137, 1
        %s317 = scalar_lea.sflag [#allocation3], %s316
        %s318 = sand.u32 %s137, 1
        %s319 = smul.addr %s318, 8
        %s320 = scalar_lea.vmem [#allocation2], %s319
        // Predicated region
        $region41: #{residual_block.1} parent=39 // pred_check
          %p321 = pneg %p147
        $region42: #{residual_block.1} parent=39 // pred_check_branch
          %323 = sbr.rel (%p321) target = $region44
        $region43: #{residual_block.1} parent=39 // pred_region
          %325 = vsyncadd %s317, 0
          %s326 = smul.addr %s19, 8
          %s327 = scalar_lea.hbm %s5, %s326
          %s329 = sshll.u32 %s320, 4
          %s330 = int_to_ptr.vmem [resolvable:$true] %s329
          %s331 = sshll.u32 %s327, 4
          %s332 = int_to_ptr.hbm [resolvable:$true] %s331
          %334 = dma.vmem_to_hbm [thread:$0]  %s330, 128, %s332, %s317
        $region44: #{residual_block.1} parent=39 // pred_fallthru
          _
      $region40: #{residual_block.1} parent=5 // pred_fallthru
        _
      %p335 = scmp.le.s32.totalorder 2, %s14
      // Predicated region
      $region45: #{residual_block.1} parent=5 // pred_check
        %p336 = pneg %p335
      $region46: #{residual_block.1} parent=5 // pred_check_branch
        %338 = sbr.rel (%p336) target = $region48
      $region47: #{residual_block.1} parent=5 // pred_region
        %s339 = ssub.s32 %s14, 2
        // Predicated region
        $region49: #{residual_block.1} parent=47 // pred_check
          %p340 = pneg %p153
        $region50: #{residual_block.1} parent=47 // pred_check_branch
          %342 = sbr.rel (%p340) target = $region52
        $region51: #{residual_block.1} parent=47 // pred_region
          %s343 = sand.u32 %s138, 1
          %s344 = scalar_lea.sflag [#allocation3], %s343
          %s345 = sand.u32 %s138, 1
          %s346 = smul.addr %s345, 8
          %s347 = scalar_lea.vmem [#allocation2], %s346
          %349 = dma.done %s344, 128
        $region52: #{residual_block.1} parent=47 // pred_fallthru
          _
      $region48: #{residual_block.1} parent=5 // pred_fallthru
        _
    $region6: #{residual_block.1} parent=1 // loop_footer
      %s18 = sadd.s32 1, %s14
    $region7: #{residual_block.1} parent=1 // loop_footer_branch
      %13 = sbr.rel target = $region3
    $region8: #{residual_block.1} parent=1 // loop_exit
      _
    %350 = vsyncpa [#allocation3], 1
    %s351 = scalar_lea.sflag [#allocation3], 1
    %352 = vsyncpa %s351, 1

</llo_original>
